<compile_context>
chip_gen: v7x
topology: tpu7x:2x2x1
jax: 0.10.0
libtpu: 0.0.40
codegen_flags: <defaults>
</compile_context>

<pallas_src>
import functools

import jax
import jax.numpy as jnp
from jax.experimental import pallas as pl
from jax.experimental.pallas import tpu as pltpu


def _round_up(x, m):
    return ((x + m - 1) // m) * m


def _adj_kernel(erow_ref, ecol_ref, adj_ref, *, TE, EK):
    """Densify one graph's adjacency from its (padded) local edge positions.

    erow_ref: (1, E_pad) int32  lane-major local src positions (sentinel == Mp for pads)
    ecol_ref: (1, E_pad) int32  lane-major local dst positions (sentinel == Mp for pads)
    adj_ref:  (Mp, Mp)  float32 this graph's dense adjacency (resident output block)
    """
    Mp = adj_ref.shape[0]
    adj_ref[...] = jnp.zeros_like(adj_ref)          # output block is the accumulator

    def step(off):
        er = erow_ref[:, pl.ds(off, TE)]            # (1, TE)  lane-held src positions
        ec = ecol_ref[:, pl.ds(off, TE)]            # (1, TE)  lane-held dst positions
        rows = jax.lax.broadcasted_iota(jnp.int32, (Mp, TE), 0)   # sublane iota
        # bf16 one-hots (0/1 exact), transposed: [node position, edge]
        Rt = (rows == er).astype(jnp.bfloat16)      # (Mp, TE)
        Ct = (rows == ec).astype(jnp.bfloat16)      # (Mp, TE)
        # Contract the edge axis on the MXU, accumulate f32 directly into adj_ref.
        adj_ref[...] += jax.lax.dot_general(
            Rt, Ct, (((1,), (1,)), ((), ())),
            preferred_element_type=jnp.float32)     # (Mp, Mp)

    if EK <= 8:
        for k in range(EK):                         # static, fully unrolled
            step(k * TE)
    else:
        def body(k, carry):
            step(pl.multiple_of(k * TE, TE))
            return carry
        jax.lax.fori_loop(0, EK, body, 0)


def graph_decoder_forward(h, edge_index, batch, num_graphs,
                          max_num_nodes=None, max_num_edges_per_graph=None):
    """Dense-batch decoding of a sparse batched graph (Pallas TPU adjacency kernel).

    Pass `max_num_nodes` / `max_num_edges_per_graph` statically to avoid per-call
    device->host syncs and recompiles in a training loop.
    """
    B = int(num_graphs)
    h = jnp.asarray(h, jnp.float32)
    if h.ndim == 2:
        # TODO(synk): the ABC allows [N, num_classes]; dense decoding of a multi-class
        # h is unspecified by the spec, so channel 0 is used (matches prior behavior).
        h = h[:, 0]
    h = h.reshape(-1)
    N = int(h.shape[0])
    E = int(edge_index.shape[1])
    batch = jnp.asarray(batch, jnp.int32)

    counts = jnp.bincount(batch, length=B).astype(jnp.int32)          # nodes per graph
    M = int(counts.max()) if max_num_nodes is None else int(max_num_nodes)
    M = max(M, 1)
    Mp = _round_up(M, 128)                                            # lane-dense width
    if Mp > 128:
        Mp = _round_up(Mp, 256)                                       # fill 256x256 MXU (v6e/v7x)

    if N == 0:
        z = jnp.zeros((B, M), jnp.float32)
        return z, jnp.zeros((B, M, M), jnp.float32), jnp.zeros((B, M), bool)

    node_off = jnp.concatenate(
        [jnp.zeros((1,), jnp.int32), jnp.cumsum(counts)[:-1].astype(jnp.int32)])
    pos = jnp.arange(N, dtype=jnp.int32) - node_off[batch]            # pos within graph

    # ---- x and mask: trivial, lane-dense, plain JAX --------------------------------
    lane_ids = jnp.arange(Mp, dtype=jnp.int32)
    mask_pad = lane_ids[None, :] < counts[:, None]                    # [B, Mp] bool
    gidx = jnp.clip(node_off[:, None] + lane_ids[None, :], 0, N - 1)  # batch-sorted nodes
    x_pad = jnp.where(mask_pad, h[gidx], 0.0)                         # [B, Mp] f32
    x = x_pad[:, :M]
    mask = mask_pad[:, :M]

    if E == 0:
        return x, jnp.zeros((B, M, M), jnp.float32), mask

    # ---- adjacency densification: one Pallas grid step per graph --------------------
    src = edge_index[0].astype(jnp.int32)
    dst = edge_index[1].astype(jnp.int32)
    # Assumes PyG-style batching: `batch` sorted and each graph's edges contiguous.
    eg = batch[src]                                                   # graph id per edge
    e_cnt = jnp.bincount(eg, length=B).astype(jnp.int32)
    e_off = jnp.concatenate(
        [jnp.zeros((1,), jnp.int32), jnp.cumsum(e_cnt)[:-1].astype(jnp.int32)])
    ps = pos[src]                                                     # local src position
    pd = pos[dst]                                                     # local dst position

    if max_num_edges_per_graph is None:
        E_max = int(e_cnt.max())                  # host sync; pass statically to avoid
    else:
        E_max = int(max_num_edges_per_graph)
    E_max = max(E_max, 1)
    TE = min(512, _round_up(E_max, 128))          # in-kernel edge chunk (lane) size
    E_pad = _round_up(E_max, TE)
    EK = E_pad // TE                              # chunks per graph (loop in-body)

    # Regroup edges per graph, lane-major.  Padded slots get sentinel Mp (matches no
    # sublane index -> all-zero one-hot column).
    # TODO(synk): for heavily skewed edges-per-graph this gathers B*E_pad >> E slots;
    # a scalar-prefetch index_map over the contiguous edge list would avoid it.
    slot = jnp.arange(E_pad, dtype=jnp.int32)
    e_idx = jnp.clip(e_off[:, None] + slot[None, :], 0, E - 1)        # [B, E_pad]
    e_valid = slot[None, :] < e_cnt[:, None]
    sent = jnp.int32(Mp)
    erow_g = jnp.where(e_valid, ps[e_idx], sent).reshape(B, 1, E_pad)
    ecol_g = jnp.where(e_valid, pd[e_idx], sent).reshape(B, 1, E_pad)

    flops = 2 * B * E_pad * Mp * Mp
    bytes_accessed = 4 * B * Mp * Mp + 2 * 4 * B * E_pad

    # VMEM budget: double-buffered (Mp,Mp) f32 output + edge blocks + one-hot tiles.
    vmem_need = 2 * Mp * Mp * 4 + 4 * E_pad * 4 + 4 * Mp * TE + (4 << 20)
    vmem_limit = int(min(max(vmem_need, 32 << 20), 56 << 20))         # fits v7x 64 MiB

    kernel = functools.partial(_adj_kernel, TE=TE, EK=EK)

    adj_pad = pl.pallas_call(
        kernel,
        grid=(B,),
        in_specs=[
            pl.BlockSpec((None, 1, E_pad), lambda b: (b, 0, 0)),      # src pos (lane-major)
            pl.BlockSpec((None, 1, E_pad), lambda b: (b, 0, 0)),      # dst pos (lane-major)
        ],
        out_specs=pl.BlockSpec((None, Mp, Mp), lambda b: (b, 0, 0)),  # per-graph adjacency
        out_shape=jax.ShapeDtypeStruct((B, Mp, Mp), jnp.float32),
        compiler_params=pltpu.CompilerParams(
            dimension_semantics=("parallel",),                        # graphs split across TCs
            vmem_limit_bytes=vmem_limit),
        cost_estimate=pl.CostEstimate(
            flops=flops, transcendentals=0, bytes_accessed=bytes_accessed),
    )(erow_g, ecol_g)

    adj = adj_pad[:, :M, :M]
    return x, adj, mask


def _reference(h, edge_index, batch, num_graphs):
    # plain-JAX reference (scatter-based) for verification
    h = h.reshape(-1)
    B = int(num_graphs)
    N = h.shape[0]
    counts = jnp.bincount(batch, length=B)
    M = int(counts.max())
    offsets = jnp.concatenate([jnp.zeros((1,), jnp.int32),
                               jnp.cumsum(counts)[:-1].astype(jnp.int32)])
    pos = jnp.arange(N, dtype=jnp.int32) - offsets[batch]
    x = jnp.zeros((B, M), jnp.float32).at[batch, pos].set(h)
    src, dst = edge_index[0], edge_index[1]
    adj = jnp.zeros((B, M, M), jnp.float32).at[batch[src], pos[src], pos[dst]].add(1.0)
    mask = jnp.arange(M)[None, :] < counts[:, None]
    return x, adj, mask


if __name__ == "__main__":
    key = jax.random.PRNGKey(0)
    kh, ke = jax.random.split(key)

    # small batched graph: 2 graphs with 5 and 8 nodes
    nodes_per_graph = [5, 8]
    edges_per_graph = [8, 12]
    B = len(nodes_per_graph)
    N = sum(nodes_per_graph)

    batch = jnp.concatenate(
        [jnp.full((n,), g, jnp.int32) for g, n in enumerate(nodes_per_graph)])
    h = jax.random.normal(kh, (N, 1), jnp.float32)

    srcs, dsts = [], []
    off = 0
    for g, (n, e) in enumerate(zip(nodes_per_graph, edges_per_graph)):
        ks, kd = jax.random.split(jax.random.fold_in(ke, g))
        srcs.append(jax.random.randint(ks, (e,), 0, n, jnp.int32) + off)
        dsts.append(jax.random.randint(kd, (e,), 0, n, jnp.int32) + off)
        off += n
    edge_index = jnp.stack([jnp.concatenate(srcs), jnp.concatenate(dsts)])  # [2, 20]

    x, adj, mask = graph_decoder_forward(
        h, edge_index, batch, B,
        max_num_nodes=max(nodes_per_graph),
        max_num_edges_per_graph=max(edges_per_graph))
    jax.block_until_ready((x, adj, mask))

    x_r, adj_r, mask_r = _reference(h, edge_index, batch, B)
    assert x.shape == x_r.shape and adj.shape == adj_r.shape and mask.shape == mask_r.shape
    assert jnp.allclose(x, x_r, atol=1e-5)
    assert jnp.allclose(adj, adj_r, atol=1e-5)
    assert jnp.array_equal(mask, mask_r)

    print("KERNEL_OK")
</pallas_src>

<mosaic_0001>
module attributes {stable_mosaic.version = 11 : i64} {
  func.func @_adj_kernel(%arg0: i32, %arg1: memref<1x1x128xi32, #tpu.memory_space<vmem>>, %arg2: memref<1x1x128xi32, #tpu.memory_space<vmem>>, %arg3: memref<1x128x128xf32, #tpu.memory_space<vmem>>) attributes {dimension_semantics = [#tpu.dimension_semantics<parallel>], iteration_bounds = array<i64: 2>, scalar_prefetch = 0 : i64, scratch_operands = 0 : i64, tpu.core_type = #tpu.core_type<tc>, window_params = [{transform_indices = @transform_0, window_bounds = array<i64: 1, 1, 128>}, {transform_indices = @transform_1, window_bounds = array<i64: 1, 1, 128>}, {transform_indices = @transform_2, window_bounds = array<i64: 1, 128, 128>}]} {
    %cst = arith.constant 0.000000e+00 : f32
    %0 = vector.broadcast %cst : f32 to vector<128x128xf32>
    %c0 = arith.constant 0 : index
    %c0_0 = arith.constant 0 : index
    %c0_1 = arith.constant 0 : index
    %1 = vector.load %arg3[%c0, %c0_0, %c0_1] : memref<1x128x128xf32, #tpu.memory_space<vmem>>, vector<1x128x128xf32>
    %2 = vector.shape_cast %1 : vector<1x128x128xf32> to vector<128x128xf32>
    %3 = vector.shape_cast %0 : vector<128x128xf32> to vector<1x128x128xf32>
    tpu.vector_store %arg3[%c0, %c0_0, %c0_1], %3 {strides = array<i32>} : memref<1x128x128xf32, #tpu.memory_space<vmem>>, vector<1x128x128xf32>,
    %c0_2 = arith.constant 0 : index
    %c0_3 = arith.constant 0 : index
    %c0_4 = arith.constant 0 : index
    %4 = vector.load %arg1[%c0_2, %c0_3, %c0_4] : memref<1x1x128xi32, #tpu.memory_space<vmem>>, vector<1x1x128xi32>
    %5 = vector.shape_cast %4 : vector<1x1x128xi32> to vector<1x128xi32>
    %c0_5 = arith.constant 0 : index
    %c0_6 = arith.constant 0 : index
    %c0_7 = arith.constant 0 : index
    %6 = vector.load %arg2[%c0_5, %c0_6, %c0_7] : memref<1x1x128xi32, #tpu.memory_space<vmem>>, vector<1x1x128xi32>
    %7 = vector.shape_cast %6 : vector<1x1x128xi32> to vector<1x128xi32>
    %8 = tpu.iota {dimensions = array<i32: 0>} : vector<128x128xi32>
    %9 = vector.broadcast %5 : vector<1x128xi32> to vector<128x128xi32>
    %10 = arith.cmpi eq, %8, %9 : vector<128x128xi32>
    %11 = arith.extui %10 : vector<128x128xi1> to vector<128x128xi32>
    %12 = arith.sitofp %11 : vector<128x128xi32> to vector<128x128xf32>
    %13 = arith.truncf %12 : vector<128x128xf32> to vector<128x128xbf16>
    %14 = vector.broadcast %7 : vector<1x128xi32> to vector<128x128xi32>
    %15 = arith.cmpi eq, %8, %14 : vector<128x128xi32>
    %16 = arith.extui %15 : vector<128x128xi1> to vector<128x128xi32>
    %17 = arith.sitofp %16 : vector<128x128xi32> to vector<128x128xf32>
    %18 = arith.truncf %17 : vector<128x128xf32> to vector<128x128xbf16>
    %c0_8 = arith.constant 0 : index
    %c0_9 = arith.constant 0 : index
    %c0_10 = arith.constant 0 : index
    %19 = vector.load %arg3[%c0_8, %c0_9, %c0_10] : memref<1x128x128xf32, #tpu.memory_space<vmem>>, vector<1x128x128xf32>
    %20 = vector.shape_cast %19 : vector<1x128x128xf32> to vector<128x128xf32>
    %cst_11 = arith.constant dense<0.000000e+00> : vector<128x128xf32>
    %21 = tpu.matmul %13, %18, %cst_11 {dimension_numbers = #tpu.dot_dimension_numbers<[1], [1], [0], [0], [0, 0, 1, 0], [], []>} : vector<128x128xbf16>, vector<128x128xbf16>, vector<128x128xf32> -> vector<128x128xf32>
    %22 = arith.addf %20, %21 : vector<128x128xf32>
    %c0_12 = arith.constant 0 : index
    %c0_13 = arith.constant 0 : index
    %c0_14 = arith.constant 0 : index
    %23 = vector.load %arg3[%c0_12, %c0_13, %c0_14] : memref<1x128x128xf32, #tpu.memory_space<vmem>>, vector<1x128x128xf32>
    %24 = vector.shape_cast %23 : vector<1x128x128xf32> to vector<128x128xf32>
    %25 = vector.shape_cast %22 : vector<128x128xf32> to vector<1x128x128xf32>
    tpu.vector_store %arg3[%c0_12, %c0_13, %c0_14], %25 {strides = array<i32>} : memref<1x128x128xf32, #tpu.memory_space<vmem>>, vector<1x128x128xf32>,
    return
  }
  func.func @transform_0(%arg0: i32) -> (i32, i32, i32) {
    %c0_i32 = arith.constant 0 : i32
    %c0_i32_0 = arith.constant 0 : i32
    %c0_i32_1 = arith.constant 0 : i32
    return %arg0, %c0_i32, %c0_i32_0 : i32, i32, i32
  }
  func.func @transform_1(%arg0: i32) -> (i32, i32, i32) {
    %c0_i32 = arith.constant 0 : i32
    %c0_i32_0 = arith.constant 0 : i32
    %c0_i32_1 = arith.constant 0 : i32
    return %arg0, %c0_i32, %c0_i32_0 : i32, i32, i32
  }
  func.func @transform_2(%arg0: i32) -> (i32, i32, i32) {
    %c0_i32 = arith.constant 0 : i32
    %c0_i32_0 = arith.constant 0 : i32
    %c0_i32_1 = arith.constant 0 : i32
    return %arg0, %c0_i32, %c0_i32_0 : i32, i32, i32
  }
}

</mosaic_0001>

<llo_original>
// kernel: tpu_custom_call.1
$region0: #{tpu_custom_call.1}
  #allocation0 [shape = 'u32[]', space=smem, size = 0x4, offset = 0x4, fixed_abs, tag = 'smem constant byte address 0x4 - core index']
  #allocation1 [shape = 'u32[144,128]{1,0:T(1,128)}', space=vmem, size = 0x12000, scoped, tag = 'internal scratch']
  %s0 = inlined_call_operand.hbm [shape: s32[2,1,128], index: 0, kind: input, shape index: {}]
  %s1 = inlined_call_operand.vmem [shape: s32[2,1,128], index: 1, kind: input, shape index: {}]
  %s2 = inlined_call_operand.hbm [shape: f32[2,128,128], index: 2, kind: output, shape index: {}]
  %s3 = sld [smem:[#allocation0]]
  $region45: #{tpu_custom_call.1} parent=0
    _
  %s5 = ssub.s32 1, %s3
  %s6 = scalar_select 0, %s5, %s3
  $region1: #{tpu_custom_call.1} parent=0
    #allocation2 [shape = 'u8[1024]{0}', space=vmem, size = 0x400, scoped, tag = 'input window, operand 0']
    #allocation3 [shape = 's32[2]{0}', space=sflag, size = 0x8, scoped, tag = 'scoped memory for tpu_custom_call.1']
    #allocation4 [shape = 's32[2]{0}', space=sflag, size = 0x8, scoped, tag = 'scoped memory for tpu_custom_call.1']
    #allocation5 [shape = 'u8[131072]{0}', space=vmem, size = 0x20000, scoped, tag = 'output window, operand 0']
    %7 = vsyncpa [#allocation3], 0
    %s8 = scalar_lea.sflag [#allocation3], 1
    %9 = vsyncpa %s8, 0
    %10 = vsyncpa [#allocation4], 0
    %s11 = scalar_lea.sflag [#allocation4], 1
    %12 = vsyncpa %s11, 0
    loop: start=0, step=1, limit=4
    $region2: #{tpu_custom_call.1} parent=1 // loop_pre_header
      _
    $region3: #{tpu_custom_call.1} parent=1 // loop_header
      %s14 = sphi 0, %s18
      %p15 = scmp.ge.s32.totalorder %s14, 4
      %s24 = sphi 0, %s26
      %s27 = sphi 0, %s24
      %s28 = sphi 0, %s27
      %s44 = sphi 0, %s28
      %s50 = sphi 0, %s52
      %s53 = sphi 0, %s50
      %s54 = sphi 0, %s53
      %s70 = sphi 0, %s54
      %s76 = sphi 0, %s78
      %s79 = sphi 0, %s76
      %s80 = sphi 0, %s79
      %s96 = sphi 0, %s80
    $region4: #{tpu_custom_call.1} parent=1 // loop_header_branch
      %17 = sbr.rel (%p15) target = $region8
    $region5: #{tpu_custom_call.1} parent=1 // loop_body
      %s19 = ssub.s32 %s14, 1
      %s20 = ssub.s32 %s14, 2
      %s21 = sadd.s32 %s14, 1
      %s22 = ssub.s32 %s14, %s21
      %p23 = scmp.eq.s32.totalorder %s22, 0
      %s25 = sadd.s32 %s24, 1
      %s26 = scalar_select %p23, %s24, %s25
      %p29 = pneg %p23
      %p30 = scmp.eq.s32.totalorder %s14, 1
      %p31 = por %p29, %p30
      %p32 = scmp.ne.s32.totalorder %s24, %s27
      %p33 = scmp.eq.s32.totalorder %s14, 0
      %p34 = por %p32, %p33
      %p35 = scmp.ne.s32.totalorder %s24, %s27
      %p36 = scmp.eq.s32.totalorder %s19, 1
      %p37 = por %p35, %p36
      %p38 = scmp.ne.s32.totalorder %s27, %s28
      %p39 = scmp.eq.s32.totalorder %s19, 0
      %p40 = por %p38, %p39
      %p41 = scmp.ne.s32.totalorder %s27, %s28
      %p42 = scmp.eq.s32.totalorder %s20, 1
      %p43 = por %p41, %p42
      %p45 = scmp.ne.s32.totalorder %s28, %s44
      %p46 = scmp.eq.s32.totalorder %s20, 0
      %p47 = por %p45, %p46
      %s48 = ssub.s32 %s14, %s21
      %p49 = scmp.eq.s32.totalorder %s48, 0
      %s51 = sadd.s32 %s50, 1
      %s52 = scalar_select %p49, %s50, %s51
      %p55 = pneg %p49
      %p56 = scmp.eq.s32.totalorder %s14, 1
      %p57 = por %p55, %p56
      %p58 = scmp.ne.s32.totalorder %s50, %s53
      %p59 = scmp.eq.s32.totalorder %s14, 0
      %p60 = por %p58, %p59
      %p61 = scmp.ne.s32.totalorder %s50, %s53
      %p62 = scmp.eq.s32.totalorder %s19, 1
      %p63 = por %p61, %p62
      %p64 = scmp.ne.s32.totalorder %s53, %s54
      %p65 = scmp.eq.s32.totalorder %s19, 0
      %p66 = por %p64, %p65
      %p67 = scmp.ne.s32.totalorder %s53, %s54
      %p68 = scmp.eq.s32.totalorder %s20, 1
      %p69 = por %p67, %p68
      %p71 = scmp.ne.s32.totalorder %s54, %s70
      %p72 = scmp.eq.s32.totalorder %s20, 0
      %p73 = por %p71, %p72
      %s74 = ssub.s32 %s14, %s21
      %p75 = scmp.eq.s32.totalorder %s74, 0
      %s77 = sadd.s32 %s76, 1
      %s78 = scalar_select %p75, %s76, %s77
      %p81 = pneg %p75
      %p82 = scmp.eq.s32.totalorder %s14, 1
      %p83 = por %p81, %p82
      %p84 = scmp.ne.s32.totalorder %s76, %s79
      %p85 = scmp.eq.s32.totalorder %s14, 0
      %p86 = por %p84, %p85
      %p87 = scmp.ne.s32.totalorder %s76, %s79
      %p88 = scmp.eq.s32.totalorder %s19, 1
      %p89 = por %p87, %p88
      %p90 = scmp.ne.s32.totalorder %s79, %s80
      %p91 = scmp.eq.s32.totalorder %s19, 0
      %p92 = por %p90, %p91
      %p93 = scmp.ne.s32.totalorder %s79, %s80
      %p94 = scmp.eq.s32.totalorder %s20, 1
      %p95 = por %p93, %p94
      %p97 = scmp.ne.s32.totalorder %s80, %s96
      %p98 = scmp.eq.s32.totalorder %s20, 0
      %p99 = por %p97, %p98
      %p100 = scmp.le.s32.totalorder 1, %s14
      %p101 = scmp.lt.s32.totalorder %s14, 3
      %p102 = pnand %p100, %p101
      %p103 = pneg %p102
      // Predicated region
      $region9: #{tpu_custom_call.1} parent=5 // pred_check
        _
      $region10: #{tpu_custom_call.1} parent=5 // pred_check_branch
        %105 = sbr.rel (%p102) target = $region12
      $region11: #{tpu_custom_call.1} parent=5 // pred_region
        %s106 = ssub.s32 %s14, 1
      $region12: #{tpu_custom_call.1} parent=5 // pred_fallthru
        _
      %p107 = scmp.lt.s32.totalorder %s14, 2
      // Predicated region
      $region13: #{tpu_custom_call.1} parent=5 // pred_check
        %p108 = pneg %p107
      $region14: #{tpu_custom_call.1} parent=5 // pred_check_branch
        %110 = sbr.rel (%p108) target = $region16
      $region15: #{tpu_custom_call.1} parent=5 // pred_region
        // Predicated region
        $region17: #{tpu_custom_call.1} parent=15 // pred_check
          %p111 = pneg %p34
        $region18: #{tpu_custom_call.1} parent=15 // pred_check_branch
          %113 = sbr.rel (%p111) target = $region20
        $region19: #{tpu_custom_call.1} parent=15 // pred_region
          %s114 = sand.u32 %s24, 1
          %s115 = scalar_lea.sflag [#allocation3], %s114
          %s116 = sand.u32 %s24, 1
          %s117 = scalar_lea.vmem [#allocation2], %s116
          %s119 = ssub.s32 16, 16
          %120 = vsyncadd %s115, %s119
          %s121 = smul.addr %s14, 16
          %s122 = scalar_lea.hbm %s0, %s121
          %s124 = sshll.u32 %s117, 4
          %s125 = int_to_ptr.vmem [resolvable:$true] %s124
          %127 = dma.hbm_to_vmem [thread:$0]  %s122, 16, %s125, %s115
        $region20: #{tpu_custom_call.1} parent=15 // pred_fallthru
          _
        // Predicated region
        $region21: #{tpu_custom_call.1} parent=15 // pred_check
          %p128 = pneg %p60
        $region22: #{tpu_custom_call.1} parent=15 // pred_check_branch
          %130 = sbr.rel (%p128) target = $region24
        $region23: #{tpu_custom_call.1} parent=15 // pred_region
          %p131 = scmp.lt.s32.totalorder %s14, 1
          %s132 = scalar_select %p131, %s14, 1
          %s133 = scalar_lea.vmem %s1, %s132
        $region24: #{tpu_custom_call.1} parent=15 // pred_fallthru
          _
      $region16: #{tpu_custom_call.1} parent=5 // pred_fallthru
        _
      %p134 = scmp.le.s32.totalorder 1, %s14
      %p135 = scmp.lt.s32.totalorder %s14, 3
      %p136 = pnand %p134, %p135
      %p137 = pneg %p136
      // Predicated region
      $region25: #{tpu_custom_call.1} parent=5 // pred_check
        _
      $region26: #{tpu_custom_call.1} parent=5 // pred_check_branch
        %139 = sbr.rel (%p136) target = $region28
      $region27: #{tpu_custom_call.1} parent=5 // pred_region
        %s140 = ssub.s32 %s14, 1
        %s141 = sand.u32 %s27, 1
        %s142 = scalar_lea.sflag [#allocation3], %s141
        %s143 = sand.u32 %s27, 1
        %s144 = scalar_lea.vmem [#allocation2], %s143
        // Predicated region
        $region29: #{tpu_custom_call.1} parent=27 // pred_check
          %p145 = pneg %p40
        $region30: #{tpu_custom_call.1} parent=27 // pred_check_branch
          %147 = sbr.rel (%p145) target = $region32
        $region31: #{tpu_custom_call.1} parent=27 // pred_region
          %148 = dma.done %s142, 16
        $region32: #{tpu_custom_call.1} parent=27 // pred_fallthru
          _
        %s149 = sand.u32 %s27, 1
        %s150 = scalar_lea.sflag [#allocation3], %s149
        %s151 = sand.u32 %s27, 1
        %s152 = scalar_lea.vmem [#allocation2], %s151
        %p153 = pneg %p40
        %p154 = pneg %p37
        %p155 = scmp.lt.s32.totalorder %s19, 1
        %s156 = scalar_select %p155, %s19, 1
        %s157 = scalar_lea.vmem %s1, %s156
        %p158 = pneg %p66
        %p159 = pneg %p63
        %p160 = pneg %p92
        %p161 = pneg %p89
        %s162 = sand.u32 %s79, 1
        %s163 = scalar_lea.sflag [#allocation4], %s162
        %s164 = sand.u32 %s79, 1
        %s165 = smul.addr %s164, 128
        %s166 = scalar_lea.vmem [#allocation5], %s165
        %p167 = scmp.lt.s32.totalorder %s19, 1
        %s168 = scalar_select %p167, %s19, 1
        %s169 = scalar_lea.vmem %s1, %s168
        %171 = vst [vmem:[%s166] sm:$0xff] 0.0
        %172 = vst [vmem:[%s166 + $0x8] sm:$0xff] 0.0
        %173 = vst [vmem:[%s166 + $0x10] sm:$0xff] 0.0
        %174 = vst [vmem:[%s166 + $0x18] sm:$0xff] 0.0
        %175 = vst [vmem:[%s166 + $0x20] sm:$0xff] 0.0
        %176 = vst [vmem:[%s166 + $0x28] sm:$0xff] 0.0
        %177 = vst [vmem:[%s166 + $0x30] sm:$0xff] 0.0
        %178 = vst [vmem:[%s166 + $0x38] sm:$0xff] 0.0
        %179 = vst [vmem:[%s166 + $0x40] sm:$0xff] 0.0
        %180 = vst [vmem:[%s166 + $0x48] sm:$0xff] 0.0
        %181 = vst [vmem:[%s166 + $0x50] sm:$0xff] 0.0
        %182 = vst [vmem:[%s166 + $0x58] sm:$0xff] 0.0
        %183 = vst [vmem:[%s166 + $0x60] sm:$0xff] 0.0
        %184 = vst [vmem:[%s166 + $0x68] sm:$0xff] 0.0
        %185 = vst [vmem:[%s166 + $0x70] sm:$0xff] 0.0
        %186 = vst [vmem:[%s166 + $0x78] sm:$0xff] 0.0
        %v187 = vld [vmem:[%s144] sm:$0x1]
        %v188 = vld [vmem:[%s169] sm:$0x1]
        %v189 = vlaneseq
        %v190 = vshrl.u32 %v189, 7
        %v191 = vadd.s32 %v190, 8
        %v192 = vadd.s32 %v190, 16
        %v193 = vadd.s32 %v190, 24
        %v194 = vadd.s32 %v190, 32
        %v195 = vadd.s32 %v190, 40
        %v196 = vadd.s32 %v190, 48
        %v197 = vadd.s32 %v190, 56
        %v198 = vadd.s32 %v190, 64
        %v199 = vadd.s32 %v190, 72
        %v200 = vadd.s32 %v190, 80
        %v201 = vadd.s32 %v190, 88
        %v202 = vadd.s32 %v190, 96
        %v203 = vadd.s32 %v190, 104
        %v204 = vadd.s32 %v190, 112
        %v205 = vadd.s32 %v190, 120
        %v206 = vlaneseq
        %v207 = vshrl.u32 %v206, 7
        %v208 = vsub.s32 0, %v207
        %v209 = vrot.slane %v187, %v208
        %vm210 = vcmp.eq.s32.totalorder %v190, %v209
        %vm211 = vcmp.eq.s32.totalorder %v191, %v209
        %vm212 = vcmp.eq.s32.totalorder %v192, %v209
        %vm213 = vcmp.eq.s32.totalorder %v193, %v209
        %vm214 = vcmp.eq.s32.totalorder %v194, %v209
        %vm215 = vcmp.eq.s32.totalorder %v195, %v209
        %vm216 = vcmp.eq.s32.totalorder %v196, %v209
        %vm217 = vcmp.eq.s32.totalorder %v197, %v209
        %vm218 = vcmp.eq.s32.totalorder %v198, %v209
        %vm219 = vcmp.eq.s32.totalorder %v199, %v209
        %vm220 = vcmp.eq.s32.totalorder %v200, %v209
        %vm221 = vcmp.eq.s32.totalorder %v201, %v209
        %vm222 = vcmp.eq.s32.totalorder %v202, %v209
        %vm223 = vcmp.eq.s32.totalorder %v203, %v209
        %vm224 = vcmp.eq.s32.totalorder %v204, %v209
        %vm225 = vcmp.eq.s32.totalorder %v205, %v209
        %v226 = vsel %vm210, 1, 0
        %v227 = vsel %vm211, 1, 0
        %v228 = vsel %vm212, 1, 0
        %v229 = vsel %vm213, 1, 0
        %v230 = vsel %vm214, 1, 0
        %v231 = vsel %vm215, 1, 0
        %v232 = vsel %vm216, 1, 0
        %v233 = vsel %vm217, 1, 0
        %v234 = vsel %vm218, 1, 0
        %v235 = vsel %vm219, 1, 0
        %v236 = vsel %vm220, 1, 0
        %v237 = vsel %vm221, 1, 0
        %v238 = vsel %vm222, 1, 0
        %v239 = vsel %vm223, 1, 0
        %v240 = vsel %vm224, 1, 0
        %v241 = vsel %vm225, 1, 0
        %v242 = vcvt.s32.f32 %v226
        %v243 = vcvt.s32.f32 %v227
        %v244 = vcvt.s32.f32 %v228
        %v245 = vcvt.s32.f32 %v229
        %v246 = vcvt.s32.f32 %v230
        %v247 = vcvt.s32.f32 %v231
        %v248 = vcvt.s32.f32 %v232
        %v249 = vcvt.s32.f32 %v233
        %v250 = vcvt.s32.f32 %v234
        %v251 = vcvt.s32.f32 %v235
        %v252 = vcvt.s32.f32 %v236
        %v253 = vcvt.s32.f32 %v237
        %v254 = vcvt.s32.f32 %v238
        %v255 = vcvt.s32.f32 %v239
        %v256 = vcvt.s32.f32 %v240
        %v257 = vcvt.s32.f32 %v241
        %v258 = vpack.c.bf16 %v243, %v242
        %v259 = vpack.c.bf16 %v245, %v244
        %v260 = vpack.c.bf16 %v247, %v246
        %v261 = vpack.c.bf16 %v249, %v248
        %v262 = vpack.c.bf16 %v251, %v250
        %v263 = vpack.c.bf16 %v253, %v252
        %v264 = vpack.c.bf16 %v255, %v254
        %v265 = vpack.c.bf16 %v257, %v256
        %v266 = vlaneseq
        %v267 = vshrl.u32 %v266, 7
        %v268 = vsub.s32 0, %v267
        %v269 = vrot.slane %v188, %v268
        %vm270 = vcmp.eq.s32.totalorder %v190, %v269
        %vm271 = vcmp.eq.s32.totalorder %v191, %v269
        %vm272 = vcmp.eq.s32.totalorder %v192, %v269
        %vm273 = vcmp.eq.s32.totalorder %v193, %v269
        %vm274 = vcmp.eq.s32.totalorder %v194, %v269
        %vm275 = vcmp.eq.s32.totalorder %v195, %v269
        %vm276 = vcmp.eq.s32.totalorder %v196, %v269
        %vm277 = vcmp.eq.s32.totalorder %v197, %v269
        %vm278 = vcmp.eq.s32.totalorder %v198, %v269
        %vm279 = vcmp.eq.s32.totalorder %v199, %v269
        %vm280 = vcmp.eq.s32.totalorder %v200, %v269
        %vm281 = vcmp.eq.s32.totalorder %v201, %v269
        %vm282 = vcmp.eq.s32.totalorder %v202, %v269
        %vm283 = vcmp.eq.s32.totalorder %v203, %v269
        %vm284 = vcmp.eq.s32.totalorder %v204, %v269
        %vm285 = vcmp.eq.s32.totalorder %v205, %v269
        %v286 = vsel %vm270, 1, 0
        %v287 = vsel %vm271, 1, 0
        %v288 = vsel %vm272, 1, 0
        %v289 = vsel %vm273, 1, 0
        %v290 = vsel %vm274, 1, 0
        %v291 = vsel %vm275, 1, 0
        %v292 = vsel %vm276, 1, 0
        %v293 = vsel %vm277, 1, 0
        %v294 = vsel %vm278, 1, 0
        %v295 = vsel %vm279, 1, 0
        %v296 = vsel %vm280, 1, 0
        %v297 = vsel %vm281, 1, 0
        %v298 = vsel %vm282, 1, 0
        %v299 = vsel %vm283, 1, 0
        %v300 = vsel %vm284, 1, 0
        %v301 = vsel %vm285, 1, 0
        %v302 = vcvt.s32.f32 %v286
        %v303 = vcvt.s32.f32 %v287
        %v304 = vcvt.s32.f32 %v288
        %v305 = vcvt.s32.f32 %v289
        %v306 = vcvt.s32.f32 %v290
        %v307 = vcvt.s32.f32 %v291
        %v308 = vcvt.s32.f32 %v292
        %v309 = vcvt.s32.f32 %v293
        %v310 = vcvt.s32.f32 %v294
        %v311 = vcvt.s32.f32 %v295
        %v312 = vcvt.s32.f32 %v296
        %v313 = vcvt.s32.f32 %v297
        %v314 = vcvt.s32.f32 %v298
        %v315 = vcvt.s32.f32 %v299
        %v316 = vcvt.s32.f32 %v300
        %v317 = vcvt.s32.f32 %v301
        %v318 = vpack.c.bf16 %v303, %v302
        %v319 = vpack.c.bf16 %v305, %v304
        %v320 = vpack.c.bf16 %v307, %v306
        %v321 = vpack.c.bf16 %v309, %v308
        %v322 = vpack.c.bf16 %v311, %v310
        %v323 = vpack.c.bf16 %v313, %v312
        %v324 = vpack.c.bf16 %v315, %v314
        %v325 = vpack.c.bf16 %v317, %v316
        %v326 = vld [vmem:[%s166] sm:$0xff]
        %v327 = vld [vmem:[%s166 + $0x8] sm:$0xff]
        %v328 = vld [vmem:[%s166 + $0x10] sm:$0xff]
        %v329 = vld [vmem:[%s166 + $0x18] sm:$0xff]
        %v330 = vld [vmem:[%s166 + $0x20] sm:$0xff]
        %v331 = vld [vmem:[%s166 + $0x28] sm:$0xff]
        %v332 = vld [vmem:[%s166 + $0x30] sm:$0xff]
        %v333 = vld [vmem:[%s166 + $0x38] sm:$0xff]
        %v334 = vld [vmem:[%s166 + $0x40] sm:$0xff]
        %v335 = vld [vmem:[%s166 + $0x48] sm:$0xff]
        %v336 = vld [vmem:[%s166 + $0x50] sm:$0xff]
        %v337 = vld [vmem:[%s166 + $0x58] sm:$0xff]
        %v338 = vld [vmem:[%s166 + $0x60] sm:$0xff]
        %v339 = vld [vmem:[%s166 + $0x68] sm:$0xff]
        %v340 = vld [vmem:[%s166 + $0x70] sm:$0xff]
        %v341 = vld [vmem:[%s166 + $0x78] sm:$0xff]
        %342 = vmatprep.subr.bf16.mxu0 0
        %343 = vmatpush1.bf16.xpose.msra.mxu0 %v318
        %344 = vmatprep.subr.bf16.mxu0 0
        %345 = vmatpush1.bf16.xpose.msra.mxu0 %v319
        %346 = vmatprep.subr.bf16.mxu0 0
        %347 = vmatpush1.bf16.xpose.msra.mxu0 %v320
        %348 = vmatprep.subr.bf16.mxu0 0
        %349 = vmatpush1.bf16.xpose.msra.mxu0 %v321
        %350 = vmatprep.subr.bf16.mxu0 0
        %351 = vmatpush1.bf16.xpose.msra.mxu0 %v322
        %352 = vmatprep.subr.bf16.mxu0 0
        %353 = vmatpush1.bf16.xpose.msra.mxu0 %v323
        %354 = vmatprep.subr.bf16.mxu0 0
        %355 = vmatpush1.bf16.xpose.msra.mxu0 %v324
        %356 = vmatprep.subr.bf16.mxu0 0
        %357 = vmatpush1.bf16.xpose.msra.mxu0 %v325
        %358 = vmatprep.subr.bf16.mxu0 0
        %359 = vmatpush1.bf16.xpose.msra.mxu0 0
        %360 = vmatprep.subr.bf16.mxu0 0
        %361 = vmatpush1.bf16.xpose.msra.mxu0 0
        %362 = vmatprep.subr.bf16.mxu0 0
        %363 = vmatpush1.bf16.xpose.msra.mxu0 0
        %364 = vmatprep.subr.bf16.mxu0 0
        %365 = vmatpush1.bf16.xpose.msra.mxu0 0
        %366 = vmatprep.subr.bf16.mxu0 0
        %367 = vmatpush1.bf16.xpose.msra.mxu0 0
        %368 = vmatprep.subr.bf16.mxu0 0
        %369 = vmatpush1.bf16.xpose.msra.mxu0 0
        %370 = vmatprep.subr.bf16.mxu0 0
        %371 = vmatpush1.bf16.xpose.msra.mxu0 0
        %372 = vmatprep.subr.bf16.mxu0 0
        %373 = vmatpush1.bf16.xpose.msra.mxu0 0
        %374 = vmatprep.mubr.bf16.mxu0 0
        %375 = vmatmul.mubr.bf16.gmra.mrb[0].mxu0 %v258
        %v376 = vpop.f32.mrb[0].mxu0
        %v377 = vadd.f32 0.0, %v376
        %v378 = vpop.f32.mrb[0].mxu0
        %v379 = vpop.f32.mrb[0].mxu0
        %v380 = vadd.f32 0.0, %v379
        %v381 = vpop.f32.mrb[0].mxu0
        %382 = vmatprep.mubr.bf16.mxu0 0
        %383 = vmatmul.mubr.bf16.gmra.mrb[0].mxu0 %v259
        %v384 = vpop.f32.mrb[0].mxu0
        %v385 = vadd.f32 0.0, %v384
        %v386 = vpop.f32.mrb[0].mxu0
        %v387 = vpop.f32.mrb[0].mxu0
        %v388 = vadd.f32 0.0, %v387
        %v389 = vpop.f32.mrb[0].mxu0
        %390 = vmatprep.mubr.bf16.mxu0 0
        %391 = vmatmul.mubr.bf16.gmra.mrb[0].mxu0 %v260
        %v392 = vpop.f32.mrb[0].mxu0
        %v393 = vadd.f32 0.0, %v392
        %v394 = vpop.f32.mrb[0].mxu0
        %v395 = vpop.f32.mrb[0].mxu0
        %v396 = vadd.f32 0.0, %v395
        %v397 = vpop.f32.mrb[0].mxu0
        %398 = vmatprep.mubr.bf16.mxu0 0
        %399 = vmatmul.mubr.bf16.gmra.mrb[0].mxu0 %v261
        %v400 = vpop.f32.mrb[0].mxu0
        %v401 = vadd.f32 0.0, %v400
        %v402 = vpop.f32.mrb[0].mxu0
        %v403 = vpop.f32.mrb[0].mxu0
        %v404 = vadd.f32 0.0, %v403
        %v405 = vpop.f32.mrb[0].mxu0
        %406 = vmatprep.mubr.bf16.mxu0 0
        %407 = vmatmul.mubr.bf16.gmra.mrb[0].mxu0 %v262
        %v408 = vpop.f32.mrb[0].mxu0
        %v409 = vadd.f32 0.0, %v408
        %v410 = vpop.f32.mrb[0].mxu0
        %v411 = vpop.f32.mrb[0].mxu0
        %v412 = vadd.f32 0.0, %v411
        %v413 = vpop.f32.mrb[0].mxu0
        %414 = vmatprep.mubr.bf16.mxu0 0
        %415 = vmatmul.mubr.bf16.gmra.mrb[0].mxu0 %v263
        %v416 = vpop.f32.mrb[0].mxu0
        %v417 = vadd.f32 0.0, %v416
        %v418 = vpop.f32.mrb[0].mxu0
        %v419 = vpop.f32.mrb[0].mxu0
        %v420 = vadd.f32 0.0, %v419
        %v421 = vpop.f32.mrb[0].mxu0
        %422 = vmatprep.mubr.bf16.mxu0 0
        %423 = vmatmul.mubr.bf16.gmra.mrb[0].mxu0 %v264
        %v424 = vpop.f32.mrb[0].mxu0
        %v425 = vadd.f32 0.0, %v424
        %v426 = vpop.f32.mrb[0].mxu0
        %v427 = vpop.f32.mrb[0].mxu0
        %v428 = vadd.f32 0.0, %v427
        %v429 = vpop.f32.mrb[0].mxu0
        %430 = vmatprep.mubr.bf16.mxu0 0
        %431 = vmatmul.mubr.bf16.gmra.mrb[0].mxu0 %v265
        %v432 = vpop.f32.mrb[0].mxu0
        %v433 = vadd.f32 0.0, %v432
        %v434 = vpop.f32.mrb[0].mxu0
        %v435 = vpop.f32.mrb[0].mxu0
        %v436 = vadd.f32 0.0, %v435
        %v437 = vpop.f32.mrb[0].mxu0
        %438 = vdwg.mxu0
        %v439 = vadd.f32 %v326, %v377
        %v440 = vadd.f32 %v327, %v380
        %v441 = vadd.f32 %v328, %v385
        %v442 = vadd.f32 %v329, %v388
        %v443 = vadd.f32 %v330, %v393
        %v444 = vadd.f32 %v331, %v396
        %v445 = vadd.f32 %v332, %v401
        %v446 = vadd.f32 %v333, %v404
        %v447 = vadd.f32 %v334, %v409
        %v448 = vadd.f32 %v335, %v412
        %v449 = vadd.f32 %v336, %v417
        %v450 = vadd.f32 %v337, %v420
        %v451 = vadd.f32 %v338, %v425
        %v452 = vadd.f32 %v339, %v428
        %v453 = vadd.f32 %v340, %v433
        %v454 = vadd.f32 %v341, %v436
        %455 = vst [vmem:[%s166] sm:$0xff] %v439
        %456 = vst [vmem:[%s166 + $0x8] sm:$0xff] %v440
        %457 = vst [vmem:[%s166 + $0x10] sm:$0xff] %v441
        %458 = vst [vmem:[%s166 + $0x18] sm:$0xff] %v442
        %459 = vst [vmem:[%s166 + $0x20] sm:$0xff] %v443
        %460 = vst [vmem:[%s166 + $0x28] sm:$0xff] %v444
        %461 = vst [vmem:[%s166 + $0x30] sm:$0xff] %v445
        %462 = vst [vmem:[%s166 + $0x38] sm:$0xff] %v446
        %463 = vst [vmem:[%s166 + $0x40] sm:$0xff] %v447
        %464 = vst [vmem:[%s166 + $0x48] sm:$0xff] %v448
        %465 = vst [vmem:[%s166 + $0x50] sm:$0xff] %v449
        %466 = vst [vmem:[%s166 + $0x58] sm:$0xff] %v450
        %467 = vst [vmem:[%s166 + $0x60] sm:$0xff] %v451
        %468 = vst [vmem:[%s166 + $0x68] sm:$0xff] %v452
        %469 = vst [vmem:[%s166 + $0x70] sm:$0xff] %v453
        %470 = vst [vmem:[%s166 + $0x78] sm:$0xff] %v454
        %s471 = sand.u32 %s79, 1
        %s472 = scalar_lea.sflag [#allocation4], %s471
        %s473 = sand.u32 %s79, 1
        %s474 = smul.addr %s473, 128
        %s475 = scalar_lea.vmem [#allocation5], %s474
        // Predicated region
        $region33: #{tpu_custom_call.1} parent=27 // pred_check
          %p476 = pneg %p89
        $region34: #{tpu_custom_call.1} parent=27 // pred_check_branch
          %478 = sbr.rel (%p476) target = $region36
        $region35: #{tpu_custom_call.1} parent=27 // pred_region
          %s480 = ssub.s32 2048, 2048
          %481 = vsyncadd %s472, %s480
          %s482 = smul.addr %s19, 16
          %s483 = smul.addr %s482, 128
          %s484 = scalar_lea.hbm %s2, %s483
          %s485 = sshll.u32 %s475, 4
          %s486 = int_to_ptr.vmem [resolvable:$true] %s485
          %491 = dma.vmem_to_hbm [thread:$0]  %s486, 2048, %s484, %s472, 128, 128, 8
        $region36: #{tpu_custom_call.1} parent=27 // pred_fallthru
          _
      $region28: #{tpu_custom_call.1} parent=5 // pred_fallthru
        _
      %p492 = scmp.le.s32.totalorder 2, %s14
      // Predicated region
      $region37: #{tpu_custom_call.1} parent=5 // pred_check
        %p493 = pneg %p492
      $region38: #{tpu_custom_call.1} parent=5 // pred_check_branch
        %495 = sbr.rel (%p493) target = $region40
      $region39: #{tpu_custom_call.1} parent=5 // pred_region
        %s496 = ssub.s32 %s14, 2
        // Predicated region
        $region41: #{tpu_custom_call.1} parent=39 // pred_check
          %p497 = pneg %p95
        $region42: #{tpu_custom_call.1} parent=39 // pred_check_branch
          %499 = sbr.rel (%p497) target = $region44
        $region43: #{tpu_custom_call.1} parent=39 // pred_region
          %s500 = sand.u32 %s80, 1
          %s501 = scalar_lea.sflag [#allocation4], %s500
          %s502 = sand.u32 %s80, 1
          %s503 = smul.addr %s502, 128
          %s504 = scalar_lea.vmem [#allocation5], %s503
          %505 = dma.done %s501, 2048
        $region44: #{tpu_custom_call.1} parent=39 // pred_fallthru
          _
      $region40: #{tpu_custom_call.1} parent=5 // pred_fallthru
        _
    $region6: #{tpu_custom_call.1} parent=1 // loop_footer
      %s18 = sadd.s32 1, %s14
    $region7: #{tpu_custom_call.1} parent=1 // loop_footer_branch
      %13 = sbr.rel target = $region3
    $region8: #{tpu_custom_call.1} parent=1 // loop_exit
      _
    %506 = vsyncpa [#allocation3], 1
    %s507 = scalar_lea.sflag [#allocation3], 1
    %508 = vsyncpa %s507, 1
    %509 = vsyncpa [#allocation4], 1
    %s510 = scalar_lea.sflag [#allocation4], 1
    %511 = vsyncpa %s510, 1

</llo_original>
